<compile_context>
chip_gen: v7x
topology: tpu7x:2x2x1
jax: 0.10.0
libtpu: 0.0.40
codegen_flags: <defaults>
</compile_context>

<pallas_src>
import jax
import jax.numpy as jnp
from jax.experimental import pallas as pl
from jax.experimental.pallas import tpu as pltpu

EPS32 = float(jnp.finfo(jnp.float32).eps)  # matches torch probs_to_logits clamp


def bernoulli_decoder_kernel(z_ref, wt_ref, b_ref, x_ref, probs_ref, nll_ref):
    # z: (TB, L) f32   wt: (L, TD) f32   b: (1, TD) f32   x: (TB, TD) bf16/f32
    y = jnp.dot(z_ref[...], wt_ref[...],
                preferred_element_type=jnp.float32) + b_ref[...]

    # torch.clamp(self.model(z), 0, 1)
    probs_ref[...] = jnp.clip(y, 0.0, 1.0)

    # Bernoulli(probs).log_prob(x): probs clamped to [eps, 1-eps] internally.
    # clip(y, eps, 1-eps) == clip(clip(y, 0, 1), eps, 1-eps).
    pc = jnp.clip(y, EPS32, 1.0 - EPS32)
    x = x_ref[...].astype(jnp.float32)
    logp = jnp.log(pc)
    log1mp = jnp.log1p(-pc)
    # x*logp + (1-x)*log1mp == log1mp + x*(logp - log1mp)
    nll_ref[...] = -(log1mp + x * (logp - log1mp))


def _round_up(x, m):
    return ((x + m - 1) // m) * m


def _pick_tile(dim, target, align):
    """Full dim if it fits the target, else the largest aligned tile <= target."""
    if dim <= target:
        return dim
    return max((target // align) * align, align)


def _tpu_tuning():
    """(tb_target, td_target, tensorcores_per_chip, physical_vmem_bytes)."""
    try:
        kind = jax.devices()[0].device_kind.lower()
    except Exception:
        kind = ""
    if "v5" in kind:
        return 128, 2048, 1, 128 << 20   # small TB: 16 MiB default scoped VMEM
    if "v6" in kind:
        return 512, 2048, 1, 128 << 20
    if "v7" in kind:
        return 256, 2048, 2, 64 << 20
    return 256, 2048, 1, 64 << 20        # conservative fallback


def _vmem_step_bytes(TB, TD, L, x_bytes):
    """Real double-buffered per-step VMEM footprint (bias pads to 8 sublanes)."""
    per_step = (TB * L * 4           # z
                + L * TD * 4         # weight
                + 8 * TD * 4         # bias (sublane-padded)
                + TB * TD * x_bytes  # x
                + TB * TD * 4        # probs
                + TB * TD * 4)       # nll
    return 2 * per_step              # 2 buffers per pipelined array


def prepare_decoder_params(weight, bias):
    """One-time parameter setup (do NOT call per forward).

    weight: (D, L) f32 in PyTorch nn.Linear layout; bias: (D,).
    Returns (weight_t (L, D), bias_2d (1, D)).
    """
    D, L = weight.shape
    return weight.T, bias.reshape(1, D)


def bernoulli_decoder_forward(z, weight_t, bias_2d, x_nchw, *, x_in_bf16=True):
    """z: (B, L) f32; weight_t: (L, D) f32; bias_2d: (1, D) f32;
    x_nchw: (B, C, H, W).  Returns (probs_x, neg_logpx_z) in NCHW, f32."""
    B, L = z.shape
    Bx, C, H, W = x_nchw.shape
    assert Bx == B
    D = C * H * W
    assert weight_t.shape == (L, D)
    assert bias_2d.shape == (1, D)

    tb_target, td_target, n_cores, phys_vmem = _tpu_tuning()

    # Binary Bernoulli targets are exact in bf16 -> halves x HBM read traffic.
    x_dtype = jnp.bfloat16 if x_in_bf16 else x_nchw.dtype
    x_flat = x_nchw.reshape(B, D).astype(x_dtype)
    x_bytes = jnp.dtype(x_dtype).itemsize

    # TB sublane-aligned to 16 (covers f32 and packed bf16), TD lane-aligned to
    # 128, or the full dimension when it is smaller than the target.
    TB = _pick_tile(B, tb_target, 16)
    TD = _pick_tile(D, td_target, 128)
    nb = pl.cdiv(B, TB)
    nd = pl.cdiv(D, TD)

    # v7x (2 TCs/chip): guarantee >= 2 blocks on a parallel axis so the second
    # TensorCore is not idle, when the problem is big enough to split.
    if n_cores >= 2 and nd * nb < 2:
        if B >= 32:
            TB = _round_up(pl.cdiv(B, 2), 16)
            nb = pl.cdiv(B, TB)
        elif D >= 256:
            TD = _round_up(pl.cdiv(D, 2), 128)
            nd = pl.cdiv(D, TD)

    # Explicit scoped-VMEM budget from the real footprint (+30% and +2 MiB for
    # Mosaic internal scratch), floored at 16 MiB and capped at physical VMEM.
    step_bytes = _vmem_step_bytes(TB, TD, L, x_bytes)
    vmem_limit = min(max(int(step_bytes * 1.3) + (2 << 20), 16 << 20), phys_vmem)

    cost = pl.CostEstimate(
        flops=2 * B * L * D,                       # the matmul
        transcendentals=2 * B * D,                 # log + log1p per element
        bytes_accessed=(4 * (B * L + L * D + D)    # z, weight, bias
                        + x_bytes * B * D          # x (bf16)
                        + 8 * B * D),              # two f32 outputs
    )

    # Grid: (D-tiles outer, B-tiles inner).  Weight/bias blocks depend only on
    # the outer index -> fetched once per column sweep, reused across batch
    # tiles.  Both axes parallel (no reduction axis).
    probs_flat, nll_flat = pl.pallas_call(
        bernoulli_decoder_kernel,
        out_shape=(
            jax.ShapeDtypeStruct((B, D), jnp.float32),
            jax.ShapeDtypeStruct((B, D), jnp.float32),
        ),
        grid_spec=pltpu.PrefetchScalarGridSpec(
            num_scalar_prefetch=0,
            grid=(nd, nb),
            in_specs=[
                pl.BlockSpec((TB, L), lambda j, i: (i, 0)),   # z
                pl.BlockSpec((L, TD), lambda j, i: (0, j)),   # weight (L, D)
                pl.BlockSpec((1, TD), lambda j, i: (0, j)),   # bias
                pl.BlockSpec((TB, TD), lambda j, i: (i, j)),  # x
            ],
            out_specs=[
                pl.BlockSpec((TB, TD), lambda j, i: (i, j)),  # probs_x
                pl.BlockSpec((TB, TD), lambda j, i: (i, j)),  # neg_logpx_z
            ],
        ),
        compiler_params=pltpu.CompilerParams(
            dimension_semantics=("parallel", "parallel"),
            vmem_limit_bytes=vmem_limit),
        cost_estimate=cost,
    )(z, weight_t, bias_2d, x_flat)

    return probs_flat.reshape(B, C, H, W), nll_flat.reshape(B, C, H, W)


if __name__ == "__main__":
    # Small shapes consistent with the module: batch=2, latent=32, image 1x16x16.
    B, L = 2, 32
    C, H, W = 1, 16, 16
    D = C * H * W

    key = jax.random.PRNGKey(0)
    k_z, k_w, k_b, k_x = jax.random.split(key, 4)

    z = jax.random.normal(k_z, (B, L), dtype=jnp.float32)
    # PyTorch nn.Linear layout: weight (out, in), bias (out,)
    weight = jax.random.normal(k_w, (D, L), dtype=jnp.float32) * 0.1
    bias = jax.random.normal(k_b, (D,), dtype=jnp.float32) * 0.1
    # Binary observation x (NCHW), the Bernoulli target
    x = (jax.random.uniform(k_x, (B, C, H, W)) > 0.5).astype(jnp.float32)

    # One-time parameter prep (transpose hoisted out of the forward path).
    weight_t, bias_2d = prepare_decoder_params(weight, bias)

    probs_x, neg_logpx_z = bernoulli_decoder_forward(z, weight_t, bias_2d, x)
    jax.block_until_ready((probs_x, neg_logpx_z))

    # Pure-JAX reference check.
    y_ref = z @ weight.T + bias
    probs_ref = jnp.clip(y_ref, 0.0, 1.0).reshape(B, C, H, W)
    pc_ref = jnp.clip(probs_ref, EPS32, 1.0 - EPS32)
    nll_ref = -(x * jnp.log(pc_ref) + (1.0 - x) * jnp.log1p(-pc_ref))

    assert probs_x.shape == (B, C, H, W) and neg_logpx_z.shape == (B, C, H, W)
    assert bool(jnp.all(probs_x >= 0.0)) and bool(jnp.all(probs_x <= 1.0))
    assert bool(jnp.all(jnp.isfinite(neg_logpx_z)))
    assert bool(jnp.allclose(probs_x, probs_ref, atol=1e-5, rtol=1e-5))
    assert bool(jnp.allclose(neg_logpx_z, nll_ref, atol=1e-4, rtol=1e-4))

    print("KERNEL_OK")
</pallas_src>

<mosaic_0001>
module attributes {stable_mosaic.version = 11 : i64} {
  func.func @bernoulli_decoder_kernel(%arg0: i32, %arg1: i32, %arg2: memref<2x32xf32, #tpu.memory_space<vmem>>, %arg3: memref<32x256xf32, #tpu.memory_space<vmem>>, %arg4: memref<1x256xf32, #tpu.memory_space<vmem>>, %arg5: memref<2x256xbf16, #tpu.memory_space<vmem>>, %arg6: memref<2x256xf32, #tpu.memory_space<vmem>>, %arg7: memref<2x256xf32, #tpu.memory_space<vmem>>) attributes {dimension_semantics = [#tpu.dimension_semantics<parallel>, #tpu.dimension_semantics<parallel>], iteration_bounds = array<i64: 1, 1>, scalar_prefetch = 0 : i64, scratch_operands = 0 : i64, tpu.core_type = #tpu.core_type<tc>, window_params = [{transform_indices = @transform_0, window_bounds = array<i64: 2, 32>}, {transform_indices = @transform_1, window_bounds = array<i64: 32, 256>}, {transform_indices = @transform_2, window_bounds = array<i64: 1, 256>}, {transform_indices = @transform_3, window_bounds = array<i64: 2, 256>}, {transform_indices = @transform_4, window_bounds = array<i64: 2, 256>}, {transform_indices = @transform_5, window_bounds = array<i64: 2, 256>}]} {
    %c0 = arith.constant 0 : index
    %c0_0 = arith.constant 0 : index
    %0 = vector.load %arg2[%c0, %c0_0] : memref<2x32xf32, #tpu.memory_space<vmem>>, vector<2x32xf32>
    %c0_1 = arith.constant 0 : index
    %c0_2 = arith.constant 0 : index
    %1 = vector.load %arg3[%c0_1, %c0_2] : memref<32x256xf32, #tpu.memory_space<vmem>>, vector<32x256xf32>
    %cst = arith.constant dense<0.000000e+00> : vector<2x256xf32>
    %2 = tpu.matmul %0, %1, %cst {dimension_numbers = #tpu.dot_dimension_numbers<[1], [0], [0], [1], [0, 0, 1, 1], [], []>} : vector<2x32xf32>, vector<32x256xf32>, vector<2x256xf32> -> vector<2x256xf32>
    %c0_3 = arith.constant 0 : index
    %c0_4 = arith.constant 0 : index
    %3 = vector.load %arg4[%c0_3, %c0_4] : memref<1x256xf32, #tpu.memory_space<vmem>>, vector<1x256xf32>
    %4 = vector.broadcast %3 : vector<1x256xf32> to vector<2x256xf32>
    %5 = arith.addf %2, %4 : vector<2x256xf32>
    %cst_5 = arith.constant 0.000000e+00 : f32
    %cst_6 = arith.constant 1.000000e+00 : f32
    %6 = vector.broadcast %cst_5 : f32 to vector<2x256xf32>
    %7 = arith.maximumf %6, %5 : vector<2x256xf32>
    %8 = vector.broadcast %cst_6 : f32 to vector<2x256xf32>
    %9 = arith.minimumf %8, %7 : vector<2x256xf32>
    %c0_7 = arith.constant 0 : index
    %c0_8 = arith.constant 0 : index
    %10 = vector.load %arg6[%c0_7, %c0_8] : memref<2x256xf32, #tpu.memory_space<vmem>>, vector<2x256xf32>
    tpu.vector_store %arg6[%c0_7, %c0_8], %9 {strides = array<i32>} : memref<2x256xf32, #tpu.memory_space<vmem>>, vector<2x256xf32>,
    %cst_9 = arith.constant 1.1920929E-7 : f32
    %cst_10 = arith.constant 0.99999988 : f32
    %11 = vector.broadcast %cst_9 : f32 to vector<2x256xf32>
    %12 = arith.maximumf %11, %5 : vector<2x256xf32>
    %13 = vector.broadcast %cst_10 : f32 to vector<2x256xf32>
    %14 = arith.minimumf %13, %12 : vector<2x256xf32>
    %c0_11 = arith.constant 0 : index
    %c0_12 = arith.constant 0 : index
    %15 = vector.load %arg5[%c0_11, %c0_12] : memref<2x256xbf16, #tpu.memory_space<vmem>>, vector<2x256xbf16>
    %16 = arith.extf %15 : vector<2x256xbf16> to vector<2x256xf32>
    %17 = math.log %14 : vector<2x256xf32>
    %cst_13 = arith.constant 0.000000e+00 : f32
    %18 = vector.broadcast %cst_13 : f32 to vector<2x256xf32>
    %19 = arith.subf %18, %14 : vector<2x256xf32>
    %20 = math.log1p %19 : vector<2x256xf32>
    %21 = arith.subf %17, %20 : vector<2x256xf32>
    %22 = arith.mulf %16, %21 : vector<2x256xf32>
    %23 = arith.addf %20, %22 : vector<2x256xf32>
    %cst_14 = arith.constant 0.000000e+00 : f32
    %24 = vector.broadcast %cst_14 : f32 to vector<2x256xf32>
    %25 = arith.subf %24, %23 : vector<2x256xf32>
    %c0_15 = arith.constant 0 : index
    %c0_16 = arith.constant 0 : index
    %26 = vector.load %arg7[%c0_15, %c0_16] : memref<2x256xf32, #tpu.memory_space<vmem>>, vector<2x256xf32>
    tpu.vector_store %arg7[%c0_15, %c0_16], %25 {strides = array<i32>} : memref<2x256xf32, #tpu.memory_space<vmem>>, vector<2x256xf32>,
    return
  }
  func.func @transform_0(%arg0: i32, %arg1: i32) -> (i32, i32) {
    %c0_i32 = arith.constant 0 : i32
    %c0_i32_0 = arith.constant 0 : i32
    return %arg1, %c0_i32 : i32, i32
  }
  func.func @transform_1(%arg0: i32, %arg1: i32) -> (i32, i32) {
    %c0_i32 = arith.constant 0 : i32
    %c0_i32_0 = arith.constant 0 : i32
    return %c0_i32, %arg0 : i32, i32
  }
  func.func @transform_2(%arg0: i32, %arg1: i32) -> (i32, i32) {
    %c0_i32 = arith.constant 0 : i32
    %c0_i32_0 = arith.constant 0 : i32
    return %c0_i32, %arg0 : i32, i32
  }
  func.func @transform_3(%arg0: i32, %arg1: i32) -> (i32, i32) {
    %c0_i32 = arith.constant 0 : i32
    return %arg1, %arg0 : i32, i32
  }
  func.func @transform_4(%arg0: i32, %arg1: i32) -> (i32, i32) {
    %c0_i32 = arith.constant 0 : i32
    return %arg1, %arg0 : i32, i32
  }
  func.func @transform_5(%arg0: i32, %arg1: i32) -> (i32, i32) {
    %c0_i32 = arith.constant 0 : i32
    return %arg1, %arg0 : i32, i32
  }
}

</mosaic_0001>

<llo_original>
// kernel: tpu_custom_call.1
$region0: #{tpu_custom_call.1}
  #allocation0 [shape = 'u32[]', space=smem, size = 0x4, offset = 0x4, fixed_abs, tag = 'smem constant byte address 0x4 - core index']
  #allocation1 [shape = 'u32[144,128]{1,0:T(1,128)}', space=vmem, size = 0x12000, scoped, tag = 'internal scratch']
  %s0 = inlined_call_operand.hbm [shape: f32[2,32], index: 0, kind: input, shape index: {}]
  %s1 = inlined_call_operand.hbm [shape: f32[32,256], index: 1, kind: input, shape index: {}]
  %s2 = inlined_call_operand.vmem [shape: f32[1,256], index: 2, kind: input, shape index: {}]
  %s3 = inlined_call_operand.vmem [shape: bf16[2,256], index: 3, kind: input, shape index: {}]
  %s4 = inlined_call_operand.hbm [shape: f32[2,256], index: 4, kind: output, shape index: {0}]
  %s5 = inlined_call_operand.hbm [shape: f32[2,256], index: 5, kind: output, shape index: {1}]
  %6 = xla_tuple %s4, %s5
  %s7 = sld [smem:[#allocation0]]
  $region42: #{tpu_custom_call.1} parent=0
    _
  %s9 = ssub.s32 1, %s7
  %s10 = scalar_select 0, %s9, %s7
  $region1: #{tpu_custom_call.1} parent=0
    #allocation2 [shape = 'u8[1024]{0}', space=vmem, size = 0x400, scoped, tag = 'input window, operand 0, single buffered']
    #allocation3 [shape = 's32[1]{0}', space=sflag, size = 0x4, scoped, tag = 'scoped memory for tpu_custom_call.1']
    #allocation4 [shape = 's32[1]{0}', space=sflag, size = 0x4, scoped, tag = 'scoped memory for tpu_custom_call.1']
    #allocation5 [shape = 'u8[32768]{0}', space=vmem, size = 0x8000, scoped, tag = 'input window, operand 1, single buffered']
    #allocation6 [shape = 's32[1]{0}', space=sflag, size = 0x4, scoped, tag = 'scoped memory for tpu_custom_call.1']
    #allocation7 [shape = 'u8[2048]{0}', space=vmem, size = 0x800, scoped, tag = 'output window, operand 0, single buffered']
    #allocation8 [shape = 'u8[2048]{0}', space=vmem, size = 0x800, scoped, tag = 'output window, operand 1, single buffered']
    #allocation9 [shape = 's32[1]{0}', space=sflag, size = 0x4, scoped, tag = 'scoped memory for tpu_custom_call.1']
    %11 = vsyncpa [#allocation3], 0
    %12 = vsyncpa [#allocation6], 0
    %13 = vsyncpa [#allocation4], 0
    %14 = vsyncpa [#allocation9], 0
    // Predicated region
    $region2: #{tpu_custom_call.1} parent=1 // pred_check
      _
    $region3: #{tpu_custom_call.1} parent=1 // pred_check_branch
      %16 = sbr.rel (0) target = $region5
    $region4: #{tpu_custom_call.1} parent=1 // pred_region
      %s18 = ssub.s32 32, 32
      %19 = vsyncadd [#allocation3], %s18
      %s21 = sshll.u32 [#allocation2], 4
      %s22 = int_to_ptr.vmem [resolvable:$true] %s21
      %24 = dma.hbm_to_vmem [thread:$0]  %s0, 32, %s22, [#allocation3]
    $region5: #{tpu_custom_call.1} parent=1 // pred_fallthru
      _
    // Predicated region
    $region6: #{tpu_custom_call.1} parent=1 // pred_check
      _
    $region7: #{tpu_custom_call.1} parent=1 // pred_check_branch
      %26 = sbr.rel (0) target = $region9
    $region8: #{tpu_custom_call.1} parent=1 // pred_region
      %s28 = ssub.s32 1024, 1024
      %29 = vsyncadd [#allocation6], %s28
      %s30 = sshll.u32 [#allocation5], 4
      %s31 = int_to_ptr.vmem [resolvable:$true] %s30
      %36 = dma.hbm_to_vmem [thread:$0]  %s1, 1024, %s31, [#allocation6], 256, 256, 16
    $region9: #{tpu_custom_call.1} parent=1 // pred_fallthru
      _
    // Predicated region
    $region10: #{tpu_custom_call.1} parent=1 // pred_check
      _
    $region11: #{tpu_custom_call.1} parent=1 // pred_check_branch
      %38 = sbr.rel (0) target = $region13
    $region12: #{tpu_custom_call.1} parent=1 // pred_region
      _
    $region13: #{tpu_custom_call.1} parent=1 // pred_fallthru
      _
    // Predicated region
    $region14: #{tpu_custom_call.1} parent=1 // pred_check
      _
    $region15: #{tpu_custom_call.1} parent=1 // pred_check_branch
      %40 = sbr.rel (0) target = $region17
    $region16: #{tpu_custom_call.1} parent=1 // pred_region
      _
    $region17: #{tpu_custom_call.1} parent=1 // pred_fallthru
      _
    // Predicated region
    $region18: #{tpu_custom_call.1} parent=1 // pred_check
      _
    $region19: #{tpu_custom_call.1} parent=1 // pred_check_branch
      %42 = sbr.rel (0) target = $region21
    $region20: #{tpu_custom_call.1} parent=1 // pred_region
      %43 = dma.done [#allocation3], 32
    $region21: #{tpu_custom_call.1} parent=1 // pred_fallthru
      _
    // Predicated region
    $region22: #{tpu_custom_call.1} parent=1 // pred_check
      _
    $region23: #{tpu_custom_call.1} parent=1 // pred_check_branch
      %45 = sbr.rel (0) target = $region25
    $region24: #{tpu_custom_call.1} parent=1 // pred_region
      %46 = dma.done [#allocation6], 1024
    $region25: #{tpu_custom_call.1} parent=1 // pred_fallthru
      _
    %v47 = vld [vmem:[#allocation2] sm:$0x3]
    %v48 = vld [vmem:[#allocation5] sm:$0xff]
    %v49 = vld [vmem:[#allocation5 + $0x8] sm:$0xff]
    %v50 = vld [vmem:[#allocation5 + $0x10] sm:$0xff]
    %v51 = vld [vmem:[#allocation5 + $0x18] sm:$0xff]
    %v52 = vld [vmem:[#allocation5 + $0x20] sm:$0xff]
    %v53 = vld [vmem:[#allocation5 + $0x28] sm:$0xff]
    %v54 = vld [vmem:[#allocation5 + $0x30] sm:$0xff]
    %v55 = vld [vmem:[#allocation5 + $0x38] sm:$0xff]
    %v56 = vld [vmem:[%s2] sm:$0x3]
    %v58 = vlaneseq
    %v59 = vshrl.u32 %v58, 7
    %v60 = vsub.s32 0, %v59
    %v61 = vrot.slane %v56, %v60
    %v62 = vlaneseq
    %v63 = vshrl.u32 %v62, 7
    %v64 = vsub.s32 1, %v63
    %v65 = vrot.slane %v56, %v64
    %vm68 = vcmask 261120
    %v70 = vsel %vm68, %v47, 0
    %72 = vmatprep.subr.mxu0 %v49
    %73 = vmatpush1.msra.mxu0 %v48
    %74 = vmatprep.subr.mxu0 %v51
    %75 = vmatpush1.msra.mxu0 %v50
    %76 = vmatprep.subr.mxu0 %v53
    %77 = vmatpush1.msra.mxu0 %v52
    %78 = vmatprep.subr.mxu0 %v55
    %79 = vmatpush1.msra.mxu0 %v54
    %80 = vmatprep.subr.mxu0 0.0
    %81 = vmatpush1.msra.mxu0 0.0
    %82 = vmatprep.subr.mxu0 0.0
    %83 = vmatpush1.msra.mxu0 0.0
    %84 = vmatprep.subr.mxu0 0.0
    %85 = vmatpush1.msra.mxu0 0.0
    %86 = vmatprep.subr.mxu0 0.0
    %87 = vmatpush1.msra.mxu0 0.0
    %88 = vmatprep.subr.mxu0 0.0
    %89 = vmatpush1.msra.mxu0 0.0
    %90 = vmatprep.subr.mxu0 0.0
    %91 = vmatpush1.msra.mxu0 0.0
    %92 = vmatprep.subr.mxu0 0.0
    %93 = vmatpush1.msra.mxu0 0.0
    %94 = vmatprep.subr.mxu0 0.0
    %95 = vmatpush1.msra.mxu0 0.0
    %96 = vmatprep.subr.mxu0 0.0
    %97 = vmatpush1.msra.mxu0 0.0
    %98 = vmatprep.subr.mxu0 0.0
    %99 = vmatpush1.msra.mxu0 0.0
    %100 = vmatprep.subr.mxu0 0.0
    %101 = vmatpush1.msra.mxu0 0.0
    %102 = vmatprep.subr.mxu0 0.0
    %103 = vmatpush1.msra.mxu0 0.0
    %104 = vmatprep.subr.mxu0 0.0
    %105 = vmatpush1.msra.mxu0 0.0
    %106 = vmatprep.subr.mxu0 0.0
    %107 = vmatpush1.msra.mxu0 0.0
    %108 = vmatprep.subr.mxu0 0.0
    %109 = vmatpush1.msra.mxu0 0.0
    %110 = vmatprep.subr.mxu0 0.0
    %111 = vmatpush1.msra.mxu0 0.0
    %112 = vmatprep.subr.mxu0 0.0
    %113 = vmatpush1.msra.mxu0 0.0
    %114 = vmatprep.subr.mxu0 0.0
    %115 = vmatpush1.msra.mxu0 0.0
    %116 = vmatprep.subr.mxu0 0.0
    %117 = vmatpush1.msra.mxu0 0.0
    %118 = vmatprep.subr.mxu0 0.0
    %119 = vmatpush1.msra.mxu0 0.0
    %120 = vmatprep.subr.mxu0 0.0
    %121 = vmatpush1.msra.mxu0 0.0
    %122 = vmatprep.subr.mxu0 0.0
    %123 = vmatpush1.msra.mxu0 0.0
    %124 = vmatprep.subr.mxu0 0.0
    %125 = vmatpush1.msra.mxu0 0.0
    %126 = vmatprep.subr.mxu0 0.0
    %127 = vmatpush1.msra.mxu0 0.0
    %128 = vmatprep.subr.mxu0 0.0
    %129 = vmatpush1.msra.mxu0 0.0
    %130 = vmatprep.subr.mxu0 0.0
    %131 = vmatpush1.msra.mxu0 0.0
    %132 = vmatprep.subr.mxu0 0.0
    %133 = vmatpush1.msra.mxu0 0.0
    %134 = vmatprep.subr.mxu0 0.0
    %135 = vmatpush1.msra.mxu0 0.0
    %136 = vmatprep.mubr.f32.mxu0 0.0
    %137 = vmatmul.mubr.f32.gmra.mrb[0].mxu0 %v70
    %v138 = vpop.f32.mrb[0].mxu0
    %v139 = vadd.f32 %v61, %v138
    %v140 = vpop.f32.mrb[0].mxu0
    %v141 = vadd.f32 %v65, %v140
    %142 = vdwg.mxu0
    %v143 = vmax.f32 %v139, 0.0
    %v144 = vmax.f32 %v141, 0.0
    %v145 = vmin.f32 %v143, 1.0
    %v146 = vmin.f32 %v144, 1.0
    %v149 = vcombine.low %v145, %v146
    %v151 = vunpack.c.l.s4 1983009808
    %v152 = vunpack.c.0.s8 %v151
    %v153 = vlaneseq
    %v154 = vshrl.u32 %v153, 7
    %v155 = vsub.s32 %v152, %v154
    %v156 = vrot.slane %v149, %v155
    %158 = vst [vmem:[#allocation7] sm:$0xf] %v156
    %v159 = vmax.f32 %v139, 1.1920929e-07
    %v160 = vmax.f32 %v141, 1.1920929e-07
    %v161 = vmin.f32 %v159, 0.9999999
    %v162 = vmin.f32 %v160, 0.9999999
    %v163 = vld [vmem:[%s3] sm:$0x3]
    %v164 = vunpack.c.l.bf16 %v163
    %v165 = vlog2.pop %v161
    %v166 = vmul.f32 %v165, 0.6931472
    %v167 = vlog2.pop %v162
    %v168 = vmul.f32 %v167, 0.6931472
    %v169 = vsub.f32 0.0, %v161
    %v170 = vsub.f32 0.0, %v162
    %v171 = vadd.f32 %v169, 1.0
    %v172 = vlog2.pop %v171
    %v173 = vmul.f32 %v172, 0.6931472
    %v174 = vmul.f32 -0.5, %v169
    %v175 = vadd.f32 %v174, 1.0
    %v176 = vmul.f32 %v175, %v169
    %v177 = vand.u32 2147483647, %v169
    %vm178 = vcmp.lt.f32.partialorder %v177, 0.0004427343
    %v179 = vsel %vm178, %v176, %v173
    %v180 = vadd.f32 %v170, 1.0
    %v181 = vlog2.pop %v180
    %v182 = vmul.f32 %v181, 0.6931472
    %v183 = vmul.f32 -0.5, %v170
    %v184 = vadd.f32 %v183, 1.0
    %v185 = vmul.f32 %v184, %v170
    %v186 = vand.u32 2147483647, %v170
    %vm187 = vcmp.lt.f32.partialorder %v186, 0.0004427343
    %v188 = vsel %vm187, %v185, %v182
    %v189 = vsub.f32 %v166, %v179
    %v190 = vsub.f32 %v168, %v188
    %v193 = vcombine.low %v189, %v190
    %v195 = vunpack.c.l.s4 1983009808
    %v196 = vunpack.c.0.s8 %v195
    %v197 = vlaneseq
    %v198 = vshrl.u32 %v197, 7
    %v199 = vsub.s32 %v196, %v198
    %v200 = vrot.slane %v193, %v199
    %v202 = vmul.f32 %v164, %v200
    %v205 = vunpack.c.l.s4 1983009808
    %v206 = vunpack.c.0.s8 %v205
    %v207 = vlaneseq
    %v208 = vshrl.u32 %v207, 7
    %v209 = vsub.s32 %v206, %v208
    %v210 = vrot.slane %v202, %v209
    %v211 = vcombine.high %v210, %v210
    %v214 = vadd.f32 %v179, %v210
    %v215 = vadd.f32 %v188, %v211
    %v216 = vsub.f32 0.0, %v214
    %v217 = vsub.f32 0.0, %v215
    %v220 = vcombine.low %v216, %v217
    %v222 = vunpack.c.l.s4 1983009808
    %v223 = vunpack.c.0.s8 %v222
    %v224 = vlaneseq
    %v225 = vshrl.u32 %v224, 7
    %v226 = vsub.s32 %v223, %v225
    %v227 = vrot.slane %v220, %v226
    %229 = vst [vmem:[#allocation8] sm:$0xf] %v227
    // Predicated region
    $region26: #{tpu_custom_call.1} parent=1 // pred_check
      _
    $region27: #{tpu_custom_call.1} parent=1 // pred_check_branch
      %231 = sbr.rel (0) target = $region29
    $region28: #{tpu_custom_call.1} parent=1 // pred_region
      %s233 = ssub.s32 64, 64
      %234 = vsyncadd [#allocation4], %s233
      %s236 = sshll.u32 [#allocation7], 4
      %s237 = int_to_ptr.vmem [resolvable:$true] %s236
      %239 = dma.vmem_to_hbm [thread:$0]  %s237, 64, %s4, [#allocation4]
    $region29: #{tpu_custom_call.1} parent=1 // pred_fallthru
      _
    // Predicated region
    $region30: #{tpu_custom_call.1} parent=1 // pred_check
      _
    $region31: #{tpu_custom_call.1} parent=1 // pred_check_branch
      %241 = sbr.rel (0) target = $region33
    $region32: #{tpu_custom_call.1} parent=1 // pred_region
      %s243 = ssub.s32 64, 64
      %244 = vsyncadd [#allocation9], %s243
      %s246 = sshll.u32 [#allocation8], 4
      %s247 = int_to_ptr.vmem [resolvable:$true] %s246
      %249 = dma.vmem_to_hbm [thread:$0]  %s247, 64, %s5, [#allocation9]
    $region33: #{tpu_custom_call.1} parent=1 // pred_fallthru
      _
    // Predicated region
    $region34: #{tpu_custom_call.1} parent=1 // pred_check
      _
    $region35: #{tpu_custom_call.1} parent=1 // pred_check_branch
      %251 = sbr.rel (0) target = $region37
    $region36: #{tpu_custom_call.1} parent=1 // pred_region
      %252 = dma.done [#allocation4], 64
    $region37: #{tpu_custom_call.1} parent=1 // pred_fallthru
      _
    // Predicated region
    $region38: #{tpu_custom_call.1} parent=1 // pred_check
      _
    $region39: #{tpu_custom_call.1} parent=1 // pred_check_branch
      %254 = sbr.rel (0) target = $region41
    $region40: #{tpu_custom_call.1} parent=1 // pred_region
      %255 = dma.done [#allocation9], 64
    $region41: #{tpu_custom_call.1} parent=1 // pred_fallthru
      _
    %256 = vsyncpa [#allocation3], 1
    %257 = vsyncpa [#allocation6], 1
    %258 = vsyncpa [#allocation4], 1
    %259 = vsyncpa [#allocation9], 1

</llo_original>
